<compile_context>
chip_gen: v7x
topology: tpu7x:2x2x1
jax: 0.10.0
libtpu: 0.0.40
codegen_flags: <defaults>
</compile_context>

<pallas_src>
import jax
import jax.numpy as jnp
from jax.experimental import pallas as pl
from jax.experimental.pallas import tpu as pltpu

_LANE = 128


def _hsigmoid_math(x):
    # relu6(x + 3) / 6 — weak-typed literals keep the compute in x's dtype.
    return jnp.clip(x + 3.0, 0.0, 6.0) * (1.0 / 6.0)


def _hsigmoid_kernel(x_ref, o_ref):
    o_ref[...] = _hsigmoid_math(x_ref[...]).astype(o_ref.dtype)


def _sublane_unit(itemsize: int) -> int:
    # Native tile sublane count: f32 -> 8, bf16 -> 16, int8/fp8 -> 32.
    return 8 * max(1, 4 // max(1, itemsize))


def _pick_block_rows(rows: int, lanes: int, itemsize: int,
                     target_block_bytes: int, sub: int) -> int:
    """Block rows for a ragged grid.

    Held near the target block size with NO exact-divisibility requirement on
    `rows` (the trailing partial block is masked by Pallas — safe for an
    elementwise op).  If the whole slab fits in one block, split into 2 steps
    so dimension_semantics=("parallel",) can shard across v7x's two TCs.
    """
    max_rows = max(sub, (target_block_bytes // (lanes * itemsize)) // sub * sub)
    if rows > max_rows:
        return max_rows
    if rows >= 2 * sub:
        return pl.cdiv(pl.cdiv(rows, 2), sub) * sub      # -> exactly 2 grid steps
    return rows  # tiny slab: single block equal to the full sublane extent


def _choose_layout(n_main: int, itemsize: int, target_block_bytes: int):
    """n_main is a multiple of 128.  Prefer the widest lane count dividing it
    (wide unmasked stores / long DMA descriptors)."""
    sub = _sublane_unit(itemsize)
    for lanes in (1024, 512, 256, _LANE):
        if n_main % lanes == 0:
            rows = n_main // lanes
            blk = _pick_block_rows(rows, lanes, itemsize, target_block_bytes, sub)
            return rows, lanes, blk
    raise AssertionError("n_main must be a multiple of 128")


def hsigmoid(
    x: jax.Array,
    *,
    target_block_bytes: int = 8 * 1024 * 1024,   # ~8 MiB blocks (x4 buffers = 32 MiB)
    vmem_limit_bytes: int = 48 * 1024 * 1024,    # explicit; headroom on v7x's 64 MiB
    donate_input: bool = False,                  # alias in->out when caller donates
) -> jax.Array:
    """Elementwise hard-sigmoid; accepts any shape (e.g. NCHW)."""
    orig_shape = x.shape
    n = x.size
    if n == 0:
        return x

    itemsize = jnp.dtype(x.dtype).itemsize
    flat = x.reshape(-1)
    n_main = (n // _LANE) * _LANE

    if n_main == 0:
        # Fewer than 128 elements: a kernel launch isn't worth it.
        return _hsigmoid_math(flat).reshape(orig_shape)

    main = flat if n_main == n else flat[:n_main]
    rows, lanes, block_rows = _choose_layout(n_main, itemsize, target_block_bytes)
    x2d = main.reshape(rows, lanes)

    grid = (pl.cdiv(rows, block_rows),)   # ragged grid: trailing block masked

    out2d = pl.pallas_call(
        _hsigmoid_kernel,
        out_shape=jax.ShapeDtypeStruct((rows, lanes), x.dtype),
        grid_spec=pltpu.PrefetchScalarGridSpec(
            num_scalar_prefetch=0,
            grid=grid,
            in_specs=[pl.BlockSpec((block_rows, lanes), lambda i: (i, 0))],
            out_specs=pl.BlockSpec((block_rows, lanes), lambda i: (i, 0)),
        ),
        compiler_params=pltpu.CompilerParams(
            dimension_semantics=("parallel",),
            vmem_limit_bytes=vmem_limit_bytes,
        ),
        input_output_aliases=({0: 0} if donate_input else {}),
    )(x2d)

    out_main = out2d.reshape(-1)
    if n_main == n:
        return out_main.reshape(orig_shape)
    # Rare ragged tail (n % 128 != 0, < 128 elements): computed in plain jnp
    # and stitched on.  Cheaper than the old pad+kernel+slice path (no padded
    # full pass), and never taken for typical conv feature-map sizes.
    tail = _hsigmoid_math(flat[n_main:])
    return jnp.concatenate([out_main, tail]).reshape(orig_shape)


def hsigmoid_ref(x):
    return jnp.clip(x + 3.0, 0.0, 6.0) / 6.0


if __name__ == "__main__":
    key = jax.random.PRNGKey(0)
    # NCHW input, same convention as the PyTorch module.
    x = jax.random.normal(key, (2, 4, 16, 16), dtype=jnp.float32) * 4.0

    y = jax.jit(hsigmoid)(x)
    jax.block_until_ready(y)

    y_ref = hsigmoid_ref(x)
    assert y.shape == x.shape and y.dtype == x.dtype
    assert jnp.allclose(y, y_ref, atol=1e-6), "mismatch vs reference"

    print("KERNEL_OK")
</pallas_src>

<mosaic_0001>
module attributes {stable_mosaic.version = 11 : i64} {
  func.func @_hsigmoid_kernel(%arg0: i32, %arg1: memref<2x1024xf32, #tpu.memory_space<vmem>>, %arg2: memref<2x1024xf32, #tpu.memory_space<vmem>>) attributes {dimension_semantics = [#tpu.dimension_semantics<parallel>], iteration_bounds = array<i64: 1>, scalar_prefetch = 0 : i64, scratch_operands = 0 : i64, tpu.core_type = #tpu.core_type<tc>, window_params = [{transform_indices = @transform_0, window_bounds = array<i64: 2, 1024>}, {transform_indices = @transform_1, window_bounds = array<i64: 2, 1024>}]} {
    %c0 = arith.constant 0 : index
    %c0_0 = arith.constant 0 : index
    %0 = vector.load %arg1[%c0, %c0_0] : memref<2x1024xf32, #tpu.memory_space<vmem>>, vector<2x1024xf32>
    %cst = arith.constant 3.000000e+00 : f32
    %1 = vector.broadcast %cst : f32 to vector<2x1024xf32>
    %2 = arith.addf %0, %1 : vector<2x1024xf32>
    %cst_1 = arith.constant 0.000000e+00 : f32
    %cst_2 = arith.constant 6.000000e+00 : f32
    %3 = vector.broadcast %cst_1 : f32 to vector<2x1024xf32>
    %4 = arith.maximumf %3, %2 : vector<2x1024xf32>
    %5 = vector.broadcast %cst_2 : f32 to vector<2x1024xf32>
    %6 = arith.minimumf %5, %4 : vector<2x1024xf32>
    %cst_3 = arith.constant 0.166666672 : f32
    %7 = vector.broadcast %cst_3 : f32 to vector<2x1024xf32>
    %8 = arith.mulf %6, %7 : vector<2x1024xf32>
    %c0_4 = arith.constant 0 : index
    %c0_5 = arith.constant 0 : index
    %9 = vector.load %arg2[%c0_4, %c0_5] : memref<2x1024xf32, #tpu.memory_space<vmem>>, vector<2x1024xf32>
    tpu.vector_store %arg2[%c0_4, %c0_5], %8 {strides = array<i32>} : memref<2x1024xf32, #tpu.memory_space<vmem>>, vector<2x1024xf32>,
    return
  }
  func.func @transform_0(%arg0: i32) -> (i32, i32) {
    %c0_i32 = arith.constant 0 : i32
    %c0_i32_0 = arith.constant 0 : i32
    return %arg0, %c0_i32 : i32, i32
  }
  func.func @transform_1(%arg0: i32) -> (i32, i32) {
    %c0_i32 = arith.constant 0 : i32
    %c0_i32_0 = arith.constant 0 : i32
    return %arg0, %c0_i32 : i32, i32
  }
}

</mosaic_0001>

<llo_original>
// kernel: hsigmoid.1
$region0: #{hsigmoid.1}
  #allocation0 [shape = 'u32[]', space=smem, size = 0x4, offset = 0x4, fixed_abs, tag = 'smem constant byte address 0x4 - core index']
  #allocation1 [shape = 'u32[144,128]{1,0:T(1,128)}', space=vmem, size = 0x12000, scoped, tag = 'internal scratch']
  %s0 = inlined_call_operand.vmem [shape: f32[2,1024], index: 0, kind: input, shape index: {}]
  %s1 = inlined_call_operand.vmem [shape: f32[2,1024], index: 1, kind: output, shape index: {}]
  %s2 = sld [smem:[#allocation0]]
  $region14: #{hsigmoid.1} parent=0
    _
  %s4 = ssub.s32 1, %s2
  %s5 = scalar_select 0, %s4, %s2
  // Predicated region
  $region2: #{hsigmoid.1} parent=0 // pred_check
    _
  $region3: #{hsigmoid.1} parent=0 // pred_check_branch
    %7 = sbr.rel (0) target = $region5
  $region4: #{hsigmoid.1} parent=0 // pred_region
    _
  $region5: #{hsigmoid.1} parent=0 // pred_fallthru
    _
  %v8 = vld [vmem:[%s0] sm:$0xff]
  %v9 = vld [vmem:[%s0 + $0x8] sm:$0xff]
  %v10 = vadd.f32 %v8, 3.0
  %v11 = vadd.f32 %v9, 3.0
  %v12 = vmax.f32 %v10, 0.0
  %v13 = vmax.f32 %v11, 0.0
  %v14 = vmin.f32 %v12, 6.0
  %v15 = vmin.f32 %v13, 6.0
  %v16 = vmul.f32 %v14, 0.16666667
  %v17 = vmul.f32 %v15, 0.16666667
  %18 = vst [vmem:[%s1] sm:$0xff] %v16
  %19 = vst [vmem:[%s1 + $0x8] sm:$0xff] %v17
  // Predicated region
  $region6: #{hsigmoid.1} parent=0 // pred_check
    _
  $region7: #{hsigmoid.1} parent=0 // pred_check_branch
    %21 = sbr.rel (0) target = $region9
  $region8: #{hsigmoid.1} parent=0 // pred_region
    _
  $region9: #{hsigmoid.1} parent=0 // pred_fallthru
    _
  // Predicated region
  $region10: #{hsigmoid.1} parent=0 // pred_check
    _
  $region11: #{hsigmoid.1} parent=0 // pred_check_branch
    %23 = sbr.rel (0) target = $region13
  $region12: #{hsigmoid.1} parent=0 // pred_region
    _
  $region13: #{hsigmoid.1} parent=0 // pred_fallthru
    _

</llo_original>
